<compile_context>
chip_gen: v5e
topology: v5e:2x2
jax: 0.10.0
libtpu: 0.0.40
codegen_flags: <defaults>
</compile_context>

<pallas_src>
import jax
import jax.numpy as jnp
from jax import lax
from jax.experimental import pallas as pl
from jax.experimental.pallas import tpu as pltpu


def value_function_kernel(x_ref, w1_ref, b1_ref, w2_ref, b2_ref,
                          wf_ref, bf_ref, o_ref):
    """Fused MLP encoder + value head for one batch tile.

    x_ref:  (TB, OBS)            input observations (compute dtype)
    w1_ref: (OBS, Hp), b1_ref: (1, Hp)   encoder layer 1 (bias f32)
    w2_ref: (Hp, Hp),  b2_ref: (1, Hp)   encoder layer 2 (bias f32)
    wf_ref: (1, Hp)                      value head weight (torch layout)
    bf_ref: (1, 1) in SMEM               value head bias
    o_ref:  (1, 1, TB)           lane-dense values for this batch tile
    """
    # Encoder layer 1: MXU matmul (f32 accumulate), f32 bias + ReLU on VPU.
    h = jnp.dot(x_ref[...], w1_ref[...], preferred_element_type=jnp.float32)
    h = jnp.maximum(h + b1_ref[...], 0.0)

    # Encoder layer 2.
    h = jnp.dot(h.astype(w2_ref.dtype), w2_ref[...],
                preferred_element_type=jnp.float32)
    h = jnp.maximum(h + b2_ref[...], 0.0)

    # Value head: contract H with an NT dot_general so the result is a
    # lane-dense (1, TB) row (batch along lanes) instead of a (TB, 1) column.
    v = lax.dot_general(wf_ref[...], h.astype(wf_ref.dtype),
                        dimension_numbers=(((1,), (1,)), ((), ())),
                        preferred_element_type=jnp.float32)       # (1, TB)
    v = v + bf_ref[0, 0]
    o_ref[...] = v.astype(o_ref.dtype).reshape(o_ref.shape)


def value_function_forward(x, w1, b1, w2, b2, wf, bf, *,
                           block_batch=512, compute_dtype=jnp.float32):
    """ValueFunction forward.  x: (B, OBS); weights in (in, out) layout except
    wf which uses torch's nn.Linear layout (1, hidden).  Returns (B, 1) f32."""
    batch, obs_dim = x.shape
    hidden = w1.shape[1]

    # --- Pad hidden dim to a lane-dense multiple of 128 (exact w/ zero pad). --
    h_pad = max(128, -(-hidden // 128) * 128)
    ph = h_pad - hidden
    if ph:
        w1 = jnp.pad(w1, ((0, 0), (0, ph)))
        b1 = jnp.pad(b1, ((0, 0), (0, ph)))
        w2 = jnp.pad(w2, ((0, ph), (0, ph)))
        b2 = jnp.pad(b2, ((0, 0), (0, ph)))
        wf = jnp.pad(wf, ((0, 0), (0, ph)))

    # --- Pad batch to a multiple of the batch tile (padded rows sliced off). --
    tb = block_batch
    b_pad = -(-batch // tb) * tb
    if b_pad != batch:
        x = jnp.pad(x, ((0, b_pad - batch), (0, 0)))
    num_tiles = b_pad // tb

    # --- dtypes: bf16 MXU operands if requested, f32 bias/ReLU/accumulate. ---
    x = x.astype(compute_dtype)
    w1 = w1.astype(compute_dtype)
    w2 = w2.astype(compute_dtype)
    wf = wf.astype(compute_dtype)
    b1 = b1.astype(jnp.float32)
    b2 = b2.astype(jnp.float32)
    bf = jnp.asarray(bf, jnp.float32).reshape(1, 1)

    itemsize = jnp.dtype(compute_dtype).itemsize
    cost = pl.CostEstimate(
        flops=2 * b_pad * (obs_dim * h_pad + h_pad * h_pad + h_pad),
        transcendentals=0,
        bytes_accessed=(x.size + w1.size + w2.size + wf.size) * itemsize
                       + (b1.size + b2.size + bf.size) * 4 + b_pad * 4,
    )

    out = pl.pallas_call(
        value_function_kernel,
        out_shape=jax.ShapeDtypeStruct((num_tiles, 1, tb), jnp.float32),
        grid=(num_tiles,),
        in_specs=[
            pl.BlockSpec((tb, obs_dim), lambda i: (i, 0)),      # x tile (pipelined)
            pl.BlockSpec((obs_dim, h_pad), lambda i: (0, 0)),   # w1 (resident)
            pl.BlockSpec((1, h_pad), lambda i: (0, 0)),         # b1 (resident)
            pl.BlockSpec((h_pad, h_pad), lambda i: (0, 0)),     # w2 (resident)
            pl.BlockSpec((1, h_pad), lambda i: (0, 0)),         # b2 (resident)
            pl.BlockSpec((1, h_pad), lambda i: (0, 0)),         # wf (resident)
            pl.BlockSpec(memory_space=pltpu.MemorySpace.SMEM),  # bf scalar
        ],
        out_specs=pl.BlockSpec((1, 1, tb), lambda i: (i, 0, 0)),
        compiler_params=pltpu.CompilerParams(
            dimension_semantics=("parallel",)),
        cost_estimate=cost,
    )(x, w1, b1, w2, b2, wf, bf)

    # Lane-dense (num_tiles, 1, TB) slab -> (B, 1); pure layout plumbing.
    return out.reshape(b_pad, 1)[:batch]


def init_params(key, obs_dim, hidden_size):
    """Deterministic synthetic parameters (PyTorch-Linear-like uniform init).
    w1/w2 stored as (in, out); wf stored in torch layout (1, hidden)."""
    ks = jax.random.split(key, 6)

    def unif(k, shape, fan_in):
        bound = 1.0 / jnp.sqrt(jnp.float32(fan_in))
        return jax.random.uniform(k, shape, jnp.float32, -bound, bound)

    w1 = unif(ks[0], (obs_dim, hidden_size), obs_dim)
    b1 = unif(ks[1], (1, hidden_size), obs_dim)
    w2 = unif(ks[2], (hidden_size, hidden_size), hidden_size)
    b2 = unif(ks[3], (1, hidden_size), hidden_size)
    wf = unif(ks[4], (1, hidden_size), hidden_size)
    bf = unif(ks[5], (1, 1), hidden_size)
    return w1, b1, w2, b2, wf, bf


def reference_forward(x, w1, b1, w2, b2, wf, bf):
    h = jnp.maximum(x @ w1 + b1, 0.0)
    h = jnp.maximum(h @ w2 + b2, 0.0)
    return h @ wf.T + bf


if __name__ == "__main__":
    batch, obs_dim, hidden_size = 200, 32, 32

    key = jax.random.PRNGKey(0)
    k_x, k_p = jax.random.split(key)
    x = jax.random.normal(k_x, (batch, obs_dim), jnp.float32)
    params = init_params(k_p, obs_dim, hidden_size)

    ref = reference_forward(x, *params)

    # f32 path (exercises a 2-tile batch grid with TB=128 + remainder padding).
    out = jax.block_until_ready(
        value_function_forward(x, *params, block_batch=128))
    assert out.shape == (batch, 1)
    assert jnp.allclose(out, ref, atol=1e-5, rtol=1e-5)

    # bf16-operand / f32-accumulate path (v6e/v7x MXU-friendly), looser check.
    out_bf16 = jax.block_until_ready(
        value_function_forward(x, *params, block_batch=128,
                               compute_dtype=jnp.bfloat16))
    assert out_bf16.shape == (batch, 1)
    assert jnp.allclose(out_bf16, ref, atol=1e-1, rtol=1e-1)

    print("KERNEL_OK")
</pallas_src>

<mosaic_0001>
module attributes {stable_mosaic.version = 11 : i64} {
  func.func @value_function_kernel(%arg0: i32, %arg1: memref<128x32xf32, #tpu.memory_space<vmem>>, %arg2: memref<32x128xf32, #tpu.memory_space<vmem>>, %arg3: memref<1x128xf32, #tpu.memory_space<vmem>>, %arg4: memref<128x128xf32, #tpu.memory_space<vmem>>, %arg5: memref<1x128xf32, #tpu.memory_space<vmem>>, %arg6: memref<1x128xf32, #tpu.memory_space<vmem>>, %arg7: memref<1x1xf32, #tpu.memory_space<smem>>, %arg8: memref<1x1x128xf32, #tpu.memory_space<vmem>>) attributes {dimension_semantics = [#tpu.dimension_semantics<parallel>], iteration_bounds = array<i64: 2>, scalar_prefetch = 0 : i64, scratch_operands = 0 : i64, tpu.core_type = #tpu.core_type<tc>, window_params = [{transform_indices = @transform_0, window_bounds = array<i64: 128, 32>}, {pipeline_mode = #tpu.pipeline_mode<synchronous>, transform_indices = @transform_1, window_bounds = array<i64: 32, 128>}, {pipeline_mode = #tpu.pipeline_mode<synchronous>, transform_indices = @transform_2, window_bounds = array<i64: 1, 128>}, {pipeline_mode = #tpu.pipeline_mode<synchronous>, transform_indices = @transform_3, window_bounds = array<i64: 128, 128>}, {pipeline_mode = #tpu.pipeline_mode<synchronous>, transform_indices = @transform_4, window_bounds = array<i64: 1, 128>}, {pipeline_mode = #tpu.pipeline_mode<synchronous>, transform_indices = @transform_5, window_bounds = array<i64: 1, 128>}, {transform_indices = @transform_6, window_bounds = array<i64: 1, 1>}, {transform_indices = @transform_7, window_bounds = array<i64: 1, 1, 128>}]} {
    %c0 = arith.constant 0 : index
    %c0_0 = arith.constant 0 : index
    %0 = vector.load %arg1[%c0, %c0_0] : memref<128x32xf32, #tpu.memory_space<vmem>>, vector<128x32xf32>
    %c0_1 = arith.constant 0 : index
    %c0_2 = arith.constant 0 : index
    %1 = vector.load %arg2[%c0_1, %c0_2] : memref<32x128xf32, #tpu.memory_space<vmem>>, vector<32x128xf32>
    %cst = arith.constant dense<0.000000e+00> : vector<128x128xf32>
    %2 = tpu.matmul %0, %1, %cst {dimension_numbers = #tpu.dot_dimension_numbers<[1], [0], [0], [1], [0, 0, 1, 1], [], []>} : vector<128x32xf32>, vector<32x128xf32>, vector<128x128xf32> -> vector<128x128xf32>
    %c0_3 = arith.constant 0 : index
    %c0_4 = arith.constant 0 : index
    %3 = vector.load %arg3[%c0_3, %c0_4] : memref<1x128xf32, #tpu.memory_space<vmem>>, vector<1x128xf32>
    %4 = vector.broadcast %3 : vector<1x128xf32> to vector<128x128xf32>
    %5 = arith.addf %2, %4 : vector<128x128xf32>
    %cst_5 = arith.constant 0.000000e+00 : f32
    %6 = vector.broadcast %cst_5 : f32 to vector<128x128xf32>
    %7 = arith.maximumf %5, %6 : vector<128x128xf32>
    %c0_6 = arith.constant 0 : index
    %c0_7 = arith.constant 0 : index
    %8 = vector.load %arg4[%c0_6, %c0_7] : memref<128x128xf32, #tpu.memory_space<vmem>>, vector<128x128xf32>
    %cst_8 = arith.constant dense<0.000000e+00> : vector<128x128xf32>
    %9 = tpu.matmul %7, %8, %cst_8 {dimension_numbers = #tpu.dot_dimension_numbers<[1], [0], [0], [1], [0, 0, 1, 1], [], []>} : vector<128x128xf32>, vector<128x128xf32>, vector<128x128xf32> -> vector<128x128xf32>
    %c0_9 = arith.constant 0 : index
    %c0_10 = arith.constant 0 : index
    %10 = vector.load %arg5[%c0_9, %c0_10] : memref<1x128xf32, #tpu.memory_space<vmem>>, vector<1x128xf32>
    %11 = vector.broadcast %10 : vector<1x128xf32> to vector<128x128xf32>
    %12 = arith.addf %9, %11 : vector<128x128xf32>
    %cst_11 = arith.constant 0.000000e+00 : f32
    %13 = vector.broadcast %cst_11 : f32 to vector<128x128xf32>
    %14 = arith.maximumf %12, %13 : vector<128x128xf32>
    %c0_12 = arith.constant 0 : index
    %c0_13 = arith.constant 0 : index
    %15 = vector.load %arg6[%c0_12, %c0_13] : memref<1x128xf32, #tpu.memory_space<vmem>>, vector<1x128xf32>
    %cst_14 = arith.constant dense<0.000000e+00> : vector<1x128xf32>
    %16 = tpu.matmul %15, %14, %cst_14 {dimension_numbers = #tpu.dot_dimension_numbers<[1], [1], [0], [0], [0, 0, 1, 0], [], []>} : vector<1x128xf32>, vector<128x128xf32>, vector<1x128xf32> -> vector<1x128xf32>
    %c0_15 = arith.constant 0 : index
    %c0_16 = arith.constant 0 : index
    %17 = memref.load %arg7[%c0_15, %c0_16] : memref<1x1xf32, #tpu.memory_space<smem>>
    %18 = vector.broadcast %17 : f32 to vector<1x128xf32>
    %19 = arith.addf %16, %18 : vector<1x128xf32>
    %20 = vector.shape_cast %19 : vector<1x128xf32> to vector<1x1x128xf32>
    %c0_17 = arith.constant 0 : index
    %c0_18 = arith.constant 0 : index
    %c0_19 = arith.constant 0 : index
    %21 = vector.load %arg8[%c0_17, %c0_18, %c0_19] : memref<1x1x128xf32, #tpu.memory_space<vmem>>, vector<1x1x128xf32>
    tpu.vector_store %arg8[%c0_17, %c0_18, %c0_19], %20 {strides = array<i32>} : memref<1x1x128xf32, #tpu.memory_space<vmem>>, vector<1x1x128xf32>,
    return
  }
  func.func @transform_0(%arg0: i32) -> (i32, i32) {
    %c0_i32 = arith.constant 0 : i32
    %c0_i32_0 = arith.constant 0 : i32
    return %arg0, %c0_i32 : i32, i32
  }
  func.func @transform_1(%arg0: i32) -> (i32, i32) {
    %c0_i32 = arith.constant 0 : i32
    %c0_i32_0 = arith.constant 0 : i32
    %c0_i32_1 = arith.constant 0 : i32
    return %c0_i32, %c0_i32_0 : i32, i32
  }
  func.func @transform_2(%arg0: i32) -> (i32, i32) {
    %c0_i32 = arith.constant 0 : i32
    %c0_i32_0 = arith.constant 0 : i32
    %c0_i32_1 = arith.constant 0 : i32
    return %c0_i32, %c0_i32_0 : i32, i32
  }
  func.func @transform_3(%arg0: i32) -> (i32, i32) {
    %c0_i32 = arith.constant 0 : i32
    %c0_i32_0 = arith.constant 0 : i32
    %c0_i32_1 = arith.constant 0 : i32
    return %c0_i32, %c0_i32_0 : i32, i32
  }
  func.func @transform_4(%arg0: i32) -> (i32, i32) {
    %c0_i32 = arith.constant 0 : i32
    %c0_i32_0 = arith.constant 0 : i32
    %c0_i32_1 = arith.constant 0 : i32
    return %c0_i32, %c0_i32_0 : i32, i32
  }
  func.func @transform_5(%arg0: i32) -> (i32, i32) {
    %c0_i32 = arith.constant 0 : i32
    %c0_i32_0 = arith.constant 0 : i32
    %c0_i32_1 = arith.constant 0 : i32
    return %c0_i32, %c0_i32_0 : i32, i32
  }
  func.func @transform_6(%arg0: i32) -> (i32, i32) {
    %c0_i32 = arith.constant 0 : i32
    %c0_i32_0 = arith.constant 0 : i32
    %c0_i32_1 = arith.constant 0 : i32
    return %c0_i32, %c0_i32_0 : i32, i32
  }
  func.func @transform_7(%arg0: i32) -> (i32, i32, i32) {
    %c0_i32 = arith.constant 0 : i32
    %c0_i32_0 = arith.constant 0 : i32
    %c0_i32_1 = arith.constant 0 : i32
    return %arg0, %c0_i32, %c0_i32_0 : i32, i32, i32
  }
}

</mosaic_0001>

<llo_original>
// kernel: tpu_custom_call.1
$region0: #{tpu_custom_call.1}
  #allocation0 [shape = 'u32[]', space=smem, size = 0x4, offset = 0x4, fixed_abs, tag = 'smem constant byte address 0x4 - core index']
  #allocation1 [shape = 'u32[72,128]{1,0:T(1,128)}', space=vmem, size = 0x9000, scoped, tag = 'internal scratch']
  #allocation2 [shape = 'f32[1,1]{1,0:T(1,128)S(6)}', space=smem, size = 0x200, scoped, tag = 'scoped memory for tpu_custom_call.1']
  %s0 = inlined_call_operand.vmem [shape: f32[256,32], index: 0, kind: input, shape index: {}]
  %s1 = inlined_call_operand.vmem [shape: f32[32,128], index: 1, kind: input, shape index: {}]
  %s2 = inlined_call_operand.vmem [shape: f32[1,128], index: 2, kind: input, shape index: {}]
  %s3 = inlined_call_operand.vmem [shape: f32[128,128], index: 3, kind: input, shape index: {}]
  %s4 = inlined_call_operand.vmem [shape: f32[1,128], index: 4, kind: input, shape index: {}]
  %s5 = inlined_call_operand.vmem [shape: f32[1,128], index: 5, kind: input, shape index: {}]
  %s6 = inlined_call_operand.<no memory space> [shape: f32[1,1], index: 6, kind: input, shape index: {}]
  %s7 = inlined_call_operand.hbm [shape: f32[2,1,128], index: 7, kind: output, shape index: {}]
  %s8 = sld [smem:[#allocation0]]
  $region61: #{tpu_custom_call.1} parent=0
    _
  %s10 = ssub.s32 1, %s8
  %s11 = scalar_select 0, %s10, %s8
  %12 = sst [smem:[#allocation2]] %s6
  $region1: #{tpu_custom_call.1} parent=0
    #allocation3 [shape = 'u8[1024]{0}', space=vmem, size = 0x400, scoped, tag = 'output window, operand 0']
    #allocation4 [shape = 's32[2]{0}', space=sflag, size = 0x8, scoped, tag = 'scoped memory for tpu_custom_call.1']
    %13 = vsyncpa [#allocation4], 0
    %s14 = scalar_lea.sflag [#allocation4], 1
    %15 = vsyncpa %s14, 0
    loop: start=0, step=1, limit=4
    $region2: #{tpu_custom_call.1} parent=1 // loop_pre_header
      _
    $region3: #{tpu_custom_call.1} parent=1 // loop_header
      %s17 = sphi 0, %s21
      %p18 = scmp.ge.s32.totalorder %s17, 4
      %s27 = sphi 0, %s29
      %s30 = sphi 0, %s27
      %s31 = sphi 0, %s30
      %s47 = sphi 0, %s31
      %s51 = sphi 0, %s51
      %s53 = sphi 0, %s51
      %s54 = sphi 0, %s53
      %s68 = sphi 0, %s54
      %s72 = sphi 0, %s72
      %s74 = sphi 0, %s72
      %s75 = sphi 0, %s74
      %s89 = sphi 0, %s75
      %s93 = sphi 0, %s93
      %s95 = sphi 0, %s93
      %s96 = sphi 0, %s95
      %s110 = sphi 0, %s96
      %s114 = sphi 0, %s114
      %s116 = sphi 0, %s114
      %s117 = sphi 0, %s116
      %s131 = sphi 0, %s117
      %s135 = sphi 0, %s135
      %s137 = sphi 0, %s135
      %s138 = sphi 0, %s137
      %s152 = sphi 0, %s138
      %s156 = sphi 0, %s156
      %s158 = sphi 0, %s156
      %s159 = sphi 0, %s158
      %s173 = sphi 0, %s159
      %s179 = sphi 0, %s181
      %s182 = sphi 0, %s179
      %s183 = sphi 0, %s182
      %s199 = sphi 0, %s183
    $region4: #{tpu_custom_call.1} parent=1 // loop_header_branch
      %20 = sbr.rel (%p18) target = $region8
    $region5: #{tpu_custom_call.1} parent=1 // loop_body
      %s22 = ssub.s32 %s17, 1
      %s23 = ssub.s32 %s17, 2
      %s24 = sadd.s32 %s17, 1
      %s25 = ssub.s32 %s17, %s24
      %p26 = scmp.eq.s32.totalorder %s25, 0
      %s28 = sadd.s32 %s27, 1
      %s29 = scalar_select %p26, %s27, %s28
      %p32 = pneg %p26
      %p33 = scmp.eq.s32.totalorder %s17, 1
      %p34 = por %p32, %p33
      %p35 = scmp.ne.s32.totalorder %s27, %s30
      %p36 = scmp.eq.s32.totalorder %s17, 0
      %p37 = por %p35, %p36
      %p38 = scmp.ne.s32.totalorder %s27, %s30
      %p39 = scmp.eq.s32.totalorder %s22, 1
      %p40 = por %p38, %p39
      %p41 = scmp.ne.s32.totalorder %s30, %s31
      %p42 = scmp.eq.s32.totalorder %s22, 0
      %p43 = por %p41, %p42
      %p44 = scmp.ne.s32.totalorder %s30, %s31
      %p45 = scmp.eq.s32.totalorder %s23, 1
      %p46 = por %p44, %p45
      %p48 = scmp.ne.s32.totalorder %s31, %s47
      %p49 = scmp.eq.s32.totalorder %s23, 0
      %p50 = por %p48, %p49
      %s52 = sadd.s32 %s51, 1
      %p55 = scmp.eq.s32.totalorder %s17, 1
      %p56 = scmp.ne.s32.totalorder %s51, %s53
      %p57 = scmp.eq.s32.totalorder %s17, 0
      %p58 = por %p56, %p57
      %p59 = scmp.ne.s32.totalorder %s51, %s53
      %p60 = scmp.eq.s32.totalorder %s22, 1
      %p61 = por %p59, %p60
      %p62 = scmp.ne.s32.totalorder %s53, %s54
      %p63 = scmp.eq.s32.totalorder %s22, 0
      %p64 = por %p62, %p63
      %p65 = scmp.ne.s32.totalorder %s53, %s54
      %p66 = scmp.eq.s32.totalorder %s23, 1
      %p67 = por %p65, %p66
      %p69 = scmp.ne.s32.totalorder %s54, %s68
      %p70 = scmp.eq.s32.totalorder %s23, 0
      %p71 = por %p69, %p70
      %s73 = sadd.s32 %s72, 1
      %p76 = scmp.eq.s32.totalorder %s17, 1
      %p77 = scmp.ne.s32.totalorder %s72, %s74
      %p78 = scmp.eq.s32.totalorder %s17, 0
      %p79 = por %p77, %p78
      %p80 = scmp.ne.s32.totalorder %s72, %s74
      %p81 = scmp.eq.s32.totalorder %s22, 1
      %p82 = por %p80, %p81
      %p83 = scmp.ne.s32.totalorder %s74, %s75
      %p84 = scmp.eq.s32.totalorder %s22, 0
      %p85 = por %p83, %p84
      %p86 = scmp.ne.s32.totalorder %s74, %s75
      %p87 = scmp.eq.s32.totalorder %s23, 1
      %p88 = por %p86, %p87
      %p90 = scmp.ne.s32.totalorder %s75, %s89
      %p91 = scmp.eq.s32.totalorder %s23, 0
      %p92 = por %p90, %p91
      %s94 = sadd.s32 %s93, 1
      %p97 = scmp.eq.s32.totalorder %s17, 1
      %p98 = scmp.ne.s32.totalorder %s93, %s95
      %p99 = scmp.eq.s32.totalorder %s17, 0
      %p100 = por %p98, %p99
      %p101 = scmp.ne.s32.totalorder %s93, %s95
      %p102 = scmp.eq.s32.totalorder %s22, 1
      %p103 = por %p101, %p102
      %p104 = scmp.ne.s32.totalorder %s95, %s96
      %p105 = scmp.eq.s32.totalorder %s22, 0
      %p106 = por %p104, %p105
      %p107 = scmp.ne.s32.totalorder %s95, %s96
      %p108 = scmp.eq.s32.totalorder %s23, 1
      %p109 = por %p107, %p108
      %p111 = scmp.ne.s32.totalorder %s96, %s110
      %p112 = scmp.eq.s32.totalorder %s23, 0
      %p113 = por %p111, %p112
      %s115 = sadd.s32 %s114, 1
      %p118 = scmp.eq.s32.totalorder %s17, 1
      %p119 = scmp.ne.s32.totalorder %s114, %s116
      %p120 = scmp.eq.s32.totalorder %s17, 0
      %p121 = por %p119, %p120
      %p122 = scmp.ne.s32.totalorder %s114, %s116
      %p123 = scmp.eq.s32.totalorder %s22, 1
      %p124 = por %p122, %p123
      %p125 = scmp.ne.s32.totalorder %s116, %s117
      %p126 = scmp.eq.s32.totalorder %s22, 0
      %p127 = por %p125, %p126
      %p128 = scmp.ne.s32.totalorder %s116, %s117
      %p129 = scmp.eq.s32.totalorder %s23, 1
      %p130 = por %p128, %p129
      %p132 = scmp.ne.s32.totalorder %s117, %s131
      %p133 = scmp.eq.s32.totalorder %s23, 0
      %p134 = por %p132, %p133
      %s136 = sadd.s32 %s135, 1
      %p139 = scmp.eq.s32.totalorder %s17, 1
      %p140 = scmp.ne.s32.totalorder %s135, %s137
      %p141 = scmp.eq.s32.totalorder %s17, 0
      %p142 = por %p140, %p141
      %p143 = scmp.ne.s32.totalorder %s135, %s137
      %p144 = scmp.eq.s32.totalorder %s22, 1
      %p145 = por %p143, %p144
      %p146 = scmp.ne.s32.totalorder %s137, %s138
      %p147 = scmp.eq.s32.totalorder %s22, 0
      %p148 = por %p146, %p147
      %p149 = scmp.ne.s32.totalorder %s137, %s138
      %p150 = scmp.eq.s32.totalorder %s23, 1
      %p151 = por %p149, %p150
      %p153 = scmp.ne.s32.totalorder %s138, %s152
      %p154 = scmp.eq.s32.totalorder %s23, 0
      %p155 = por %p153, %p154
      %s157 = sadd.s32 %s156, 1
      %p160 = scmp.eq.s32.totalorder %s17, 1
      %p161 = scmp.ne.s32.totalorder %s156, %s158
      %p162 = scmp.eq.s32.totalorder %s17, 0
      %p163 = por %p161, %p162
      %p164 = scmp.ne.s32.totalorder %s156, %s158
      %p165 = scmp.eq.s32.totalorder %s22, 1
      %p166 = por %p164, %p165
      %p167 = scmp.ne.s32.totalorder %s158, %s159
      %p168 = scmp.eq.s32.totalorder %s22, 0
      %p169 = por %p167, %p168
      %p170 = scmp.ne.s32.totalorder %s158, %s159
      %p171 = scmp.eq.s32.totalorder %s23, 1
      %p172 = por %p170, %p171
      %p174 = scmp.ne.s32.totalorder %s159, %s173
      %p175 = scmp.eq.s32.totalorder %s23, 0
      %p176 = por %p174, %p175
      %s177 = ssub.s32 %s17, %s24
      %p178 = scmp.eq.s32.totalorder %s177, 0
      %s180 = sadd.s32 %s179, 1
      %s181 = scalar_select %p178, %s179, %s180
      %p184 = pneg %p178
      %p185 = scmp.eq.s32.totalorder %s17, 1
      %p186 = por %p184, %p185
      %p187 = scmp.ne.s32.totalorder %s179, %s182
      %p188 = scmp.eq.s32.totalorder %s17, 0
      %p189 = por %p187, %p188
      %p190 = scmp.ne.s32.totalorder %s179, %s182
      %p191 = scmp.eq.s32.totalorder %s22, 1
      %p192 = por %p190, %p191
      %p193 = scmp.ne.s32.totalorder %s182, %s183
      %p194 = scmp.eq.s32.totalorder %s22, 0
      %p195 = por %p193, %p194
      %p196 = scmp.ne.s32.totalorder %s182, %s183
      %p197 = scmp.eq.s32.totalorder %s23, 1
      %p198 = por %p196, %p197
      %p200 = scmp.ne.s32.totalorder %s183, %s199
      %p201 = scmp.eq.s32.totalorder %s23, 0
      %p202 = por %p200, %p201
      %p203 = scmp.le.s32.totalorder 1, %s17
      %p204 = scmp.lt.s32.totalorder %s17, 3
      %p205 = pnand %p203, %p204
      %p206 = pneg %p205
      // Predicated region
      $region9: #{tpu_custom_call.1} parent=5 // pred_check
        _
      $region10: #{tpu_custom_call.1} parent=5 // pred_check_branch
        %208 = sbr.rel (%p205) target = $region12
      $region11: #{tpu_custom_call.1} parent=5 // pred_region
        %s209 = ssub.s32 %s17, 1
        // Predicated region
        $region13: #{tpu_custom_call.1} parent=11 // pred_check
          %p210 = pneg %p64
        $region14: #{tpu_custom_call.1} parent=11 // pred_check_branch
          %212 = sbr.rel (%p210) target = $region16
        $region15: #{tpu_custom_call.1} parent=11 // pred_region
          _
        $region16: #{tpu_custom_call.1} parent=11 // pred_fallthru
          _
        // Predicated region
        $region17: #{tpu_custom_call.1} parent=11 // pred_check
          %p213 = pneg %p85
        $region18: #{tpu_custom_call.1} parent=11 // pred_check_branch
          %215 = sbr.rel (%p213) target = $region20
        $region19: #{tpu_custom_call.1} parent=11 // pred_region
          _
        $region20: #{tpu_custom_call.1} parent=11 // pred_fallthru
          _
        // Predicated region
        $region21: #{tpu_custom_call.1} parent=11 // pred_check
          %p216 = pneg %p106
        $region22: #{tpu_custom_call.1} parent=11 // pred_check_branch
          %218 = sbr.rel (%p216) target = $region24
        $region23: #{tpu_custom_call.1} parent=11 // pred_region
          _
        $region24: #{tpu_custom_call.1} parent=11 // pred_fallthru
          _
        // Predicated region
        $region25: #{tpu_custom_call.1} parent=11 // pred_check
          %p219 = pneg %p127
        $region26: #{tpu_custom_call.1} parent=11 // pred_check_branch
          %221 = sbr.rel (%p219) target = $region28
        $region27: #{tpu_custom_call.1} parent=11 // pred_region
          _
        $region28: #{tpu_custom_call.1} parent=11 // pred_fallthru
          _
        // Predicated region
        $region29: #{tpu_custom_call.1} parent=11 // pred_check
          %p222 = pneg %p148
        $region30: #{tpu_custom_call.1} parent=11 // pred_check_branch
          %224 = sbr.rel (%p222) target = $region32
        $region31: #{tpu_custom_call.1} parent=11 // pred_region
          _
        $region32: #{tpu_custom_call.1} parent=11 // pred_fallthru
          _
        // Predicated region
        $region33: #{tpu_custom_call.1} parent=11 // pred_check
          %p225 = pneg %p169
        $region34: #{tpu_custom_call.1} parent=11 // pred_check_branch
          %227 = sbr.rel (%p225) target = $region36
        $region35: #{tpu_custom_call.1} parent=11 // pred_region
          _
        $region36: #{tpu_custom_call.1} parent=11 // pred_fallthru
          _
      $region12: #{tpu_custom_call.1} parent=5 // pred_fallthru
        _
      %p228 = scmp.lt.s32.totalorder %s17, 2
      // Predicated region
      $region37: #{tpu_custom_call.1} parent=5 // pred_check
        %p229 = pneg %p228
      $region38: #{tpu_custom_call.1} parent=5 // pred_check_branch
        %231 = sbr.rel (%p229) target = $region40
      $region39: #{tpu_custom_call.1} parent=5 // pred_region
        // Predicated region
        $region41: #{tpu_custom_call.1} parent=39 // pred_check
          %p232 = pneg %p37
        $region42: #{tpu_custom_call.1} parent=39 // pred_check_branch
          %234 = sbr.rel (%p232) target = $region44
        $region43: #{tpu_custom_call.1} parent=39 // pred_region
          %s235 = smul.u32 16, %s17
          %p236 = scmp.lt.s32.totalorder %s235, 31
          %s237 = scalar_select %p236, %s235, 31
          %s238 = smul.addr %s237, 8
          %s239 = scalar_lea.vmem %s0, %s238
          %s240 = smul.u32 16, %s17
        $region44: #{tpu_custom_call.1} parent=39 // pred_fallthru
          _
      $region40: #{tpu_custom_call.1} parent=5 // pred_fallthru
        _
      %p241 = scmp.le.s32.totalorder 1, %s17
      %p242 = scmp.lt.s32.totalorder %s17, 3
      %p243 = pnand %p241, %p242
      %p244 = pneg %p243
      // Predicated region
      $region45: #{tpu_custom_call.1} parent=5 // pred_check
        _
      $region46: #{tpu_custom_call.1} parent=5 // pred_check_branch
        %246 = sbr.rel (%p243) target = $region48
      $region47: #{tpu_custom_call.1} parent=5 // pred_region
        %s247 = ssub.s32 %s17, 1
        %s248 = smul.u32 16, %s22
        %p249 = scmp.lt.s32.totalorder %s248, 31
        %s250 = scalar_select %p249, %s248, 31
        %s251 = smul.addr %s250, 8
        %s252 = scalar_lea.vmem %s0, %s251
        %p253 = pneg %p43
        %p254 = pneg %p40
        %p255 = pneg %p64
        %p256 = pneg %p61
        %p257 = pneg %p85
        %p258 = pneg %p82
        %p259 = pneg %p106
        %p260 = pneg %p103
        %p261 = pneg %p127
        %p262 = pneg %p124
        %p263 = pneg %p148
        %p264 = pneg %p145
        %p265 = pneg %p169
        %p266 = pneg %p166
        %p267 = pneg %p195
        %p268 = pneg %p192
        %s269 = sand.u32 %s182, 1
        %s270 = scalar_lea.sflag [#allocation4], %s269
        %s271 = sand.u32 %s182, 1
        %s272 = scalar_lea.vmem [#allocation3], %s271
        %s273 = smul.u32 16, %s22
        %p274 = scmp.lt.s32.totalorder %s273, 31
        %s275 = scalar_select %p274, %s273, 31
        %s276 = smul.addr %s275, 8
        %s277 = scalar_lea.vmem %s0, %s276
        %s278 = smul.u32 16, %s22
        %v279 = vld [vmem:[%s277] sm:$0xff]
        %v280 = vld [vmem:[%s277 + $0x8] sm:$0xff]
        %v281 = vld [vmem:[%s277 + $0x10] sm:$0xff]
        %v282 = vld [vmem:[%s277 + $0x18] sm:$0xff]
        %v283 = vld [vmem:[%s277 + $0x20] sm:$0xff]
        %v284 = vld [vmem:[%s277 + $0x28] sm:$0xff]
        %v285 = vld [vmem:[%s277 + $0x30] sm:$0xff]
        %v286 = vld [vmem:[%s277 + $0x38] sm:$0xff]
        %v287 = vld [vmem:[%s277 + $0x40] sm:$0xff]
        %v288 = vld [vmem:[%s277 + $0x48] sm:$0xff]
        %v289 = vld [vmem:[%s277 + $0x50] sm:$0xff]
        %v290 = vld [vmem:[%s277 + $0x58] sm:$0xff]
        %v291 = vld [vmem:[%s277 + $0x60] sm:$0xff]
        %v292 = vld [vmem:[%s277 + $0x68] sm:$0xff]
        %v293 = vld [vmem:[%s277 + $0x70] sm:$0xff]
        %v294 = vld [vmem:[%s277 + $0x78] sm:$0xff]
        %v295 = vld [vmem:[%s1] sm:$0xff]
        %v296 = vld [vmem:[%s1 + $0x8] sm:$0xff]
        %v297 = vld [vmem:[%s1 + $0x10] sm:$0xff]
        %v298 = vld [vmem:[%s1 + $0x18] sm:$0xff]
        %v299 = vld [vmem:[%s2] sm:$0x1]
        %v301 = vperm.slane %v299, 0
        %vm303 = vcmask 261120
        %v305 = vsel %vm303, %v279, 0
        %v308 = vsel %vm303, %v280, 0
        %v311 = vsel %vm303, %v281, 0
        %v314 = vsel %vm303, %v282, 0
        %v317 = vsel %vm303, %v283, 0
        %v320 = vsel %vm303, %v284, 0
        %v323 = vsel %vm303, %v285, 0
        %v326 = vsel %vm303, %v286, 0
        %v329 = vsel %vm303, %v287, 0
        %v332 = vsel %vm303, %v288, 0
        %v335 = vsel %vm303, %v289, 0
        %v338 = vsel %vm303, %v290, 0
        %v341 = vsel %vm303, %v291, 0
        %v344 = vsel %vm303, %v292, 0
        %v347 = vsel %vm303, %v293, 0
        %v350 = vsel %vm303, %v294, 0
        %352 = vmatpush.msra.mxu0 0.0
        %353 = vmatpush.msra.mxu0 0.0
        %354 = vmatpush.msra.mxu0 0.0
        %355 = vmatpush.msra.mxu0 0.0
        %356 = vmatpush.msra.mxu0 0.0
        %357 = vmatpush.msra.mxu0 0.0
        %358 = vmatpush.msra.mxu0 0.0
        %359 = vmatpush.msra.mxu0 0.0
        %360 = vmatpush.msra.mxu0 0.0
        %361 = vmatpush.msra.mxu0 0.0
        %362 = vmatpush.msra.mxu0 0.0
        %363 = vmatpush.msra.mxu0 0.0
        %364 = vmatpush.msra.mxu0 %v298
        %365 = vmatpush.msra.mxu0 %v297
        %366 = vmatpush.msra.mxu0 %v296
        %367 = vmatpush.msra.mxu0 %v295
        %368 = vmatmul.f32.gmra.mxu0 %v305
        %v369 = vpop.f32.mrf.mxu0
        %v370 = vadd.f32 %v301, %v369
        %371 = vmatmul.f32.gmra.mxu0 %v308
        %v372 = vpop.f32.mrf.mxu0
        %v373 = vadd.f32 %v301, %v372
        %374 = vmatmul.f32.gmra.mxu0 %v311
        %v375 = vpop.f32.mrf.mxu0
        %v376 = vadd.f32 %v301, %v375
        %377 = vmatmul.f32.gmra.mxu0 %v314
        %v378 = vpop.f32.mrf.mxu0
        %v379 = vadd.f32 %v301, %v378
        %380 = vmatmul.f32.gmra.mxu0 %v317
        %v381 = vpop.f32.mrf.mxu0
        %v382 = vadd.f32 %v301, %v381
        %383 = vmatmul.f32.gmra.mxu0 %v320
        %v384 = vpop.f32.mrf.mxu0
        %v385 = vadd.f32 %v301, %v384
        %386 = vmatmul.f32.gmra.mxu0 %v323
        %v387 = vpop.f32.mrf.mxu0
        %v388 = vadd.f32 %v301, %v387
        %389 = vmatmul.f32.gmra.mxu0 %v326
        %v390 = vpop.f32.mrf.mxu0
        %v391 = vadd.f32 %v301, %v390
        %392 = vmatmul.f32.gmra.mxu0 %v329
        %v393 = vpop.f32.mrf.mxu0
        %v394 = vadd.f32 %v301, %v393
        %395 = vmatmul.f32.gmra.mxu0 %v332
        %v396 = vpop.f32.mrf.mxu0
        %v397 = vadd.f32 %v301, %v396
        %398 = vmatmul.f32.gmra.mxu0 %v335
        %v399 = vpop.f32.mrf.mxu0
        %v400 = vadd.f32 %v301, %v399
        %401 = vmatmul.f32.gmra.mxu0 %v338
        %v402 = vpop.f32.mrf.mxu0
        %v403 = vadd.f32 %v301, %v402
        %404 = vmatmul.f32.gmra.mxu0 %v341
        %v405 = vpop.f32.mrf.mxu0
        %v406 = vadd.f32 %v301, %v405
        %407 = vmatmul.f32.gmra.mxu0 %v344
        %v408 = vpop.f32.mrf.mxu0
        %v409 = vadd.f32 %v301, %v408
        %410 = vmatmul.f32.gmra.mxu0 %v347
        %v411 = vpop.f32.mrf.mxu0
        %v412 = vadd.f32 %v301, %v411
        %413 = vmatmul.f32.gmra.mxu0 %v350
        %v414 = vpop.f32.mrf.mxu0
        %v415 = vadd.f32 %v301, %v414
        %416 = vdwg.mxu0
        %v417 = vmax.f32 %v370, 0.0
        %v418 = vmax.f32 %v373, 0.0
        %v419 = vmax.f32 %v376, 0.0
        %v420 = vmax.f32 %v379, 0.0
        %v421 = vmax.f32 %v382, 0.0
        %v422 = vmax.f32 %v385, 0.0
        %v423 = vmax.f32 %v388, 0.0
        %v424 = vmax.f32 %v391, 0.0
        %v425 = vmax.f32 %v394, 0.0
        %v426 = vmax.f32 %v397, 0.0
        %v427 = vmax.f32 %v400, 0.0
        %v428 = vmax.f32 %v403, 0.0
        %v429 = vmax.f32 %v406, 0.0
        %v430 = vmax.f32 %v409, 0.0
        %v431 = vmax.f32 %v412, 0.0
        %v432 = vmax.f32 %v415, 0.0
        %v433 = vld [vmem:[%s3] sm:$0xff]
        %v434 = vld [vmem:[%s3 + $0x8] sm:$0xff]
        %v435 = vld [vmem:[%s3 + $0x10] sm:$0xff]
        %v436 = vld [vmem:[%s3 + $0x18] sm:$0xff]
        %v437 = vld [vmem:[%s3 + $0x20] sm:$0xff]
        %v438 = vld [vmem:[%s3 + $0x28] sm:$0xff]
        %v439 = vld [vmem:[%s3 + $0x30] sm:$0xff]
        %v440 = vld [vmem:[%s3 + $0x38] sm:$0xff]
        %v441 = vld [vmem:[%s3 + $0x40] sm:$0xff]
        %v442 = vld [vmem:[%s3 + $0x48] sm:$0xff]
        %v443 = vld [vmem:[%s3 + $0x50] sm:$0xff]
        %v444 = vld [vmem:[%s3 + $0x58] sm:$0xff]
        %v445 = vld [vmem:[%s3 + $0x60] sm:$0xff]
        %v446 = vld [vmem:[%s3 + $0x68] sm:$0xff]
        %v447 = vld [vmem:[%s3 + $0x70] sm:$0xff]
        %v448 = vld [vmem:[%s3 + $0x78] sm:$0xff]
        %v449 = vld [vmem:[%s4] sm:$0x1]
        %v451 = vperm.slane %v449, 0
        %453 = vmatpush.msra.mxu0 %v448
        %454 = vmatpush.msra.mxu0 %v447
        %455 = vmatpush.msra.mxu0 %v446
        %456 = vmatpush.msra.mxu0 %v445
        %457 = vmatpush.msra.mxu0 %v444
        %458 = vmatpush.msra.mxu0 %v443
        %459 = vmatpush.msra.mxu0 %v442
        %460 = vmatpush.msra.mxu0 %v441
        %461 = vmatpush.msra.mxu0 %v440
        %462 = vmatpush.msra.mxu0 %v439
        %463 = vmatpush.msra.mxu0 %v438
        %464 = vmatpush.msra.mxu0 %v437
        %465 = vmatpush.msra.mxu0 %v436
        %466 = vmatpush.msra.mxu0 %v435
        %467 = vmatpush.msra.mxu0 %v434
        %468 = vmatpush.msra.mxu0 %v433
        %469 = vmatmul.f32.gmra.mxu0 %v417
        %v470 = vpop.f32.mrf.mxu0
        %v471 = vadd.f32 %v451, %v470
        %472 = vmatmul.f32.gmra.mxu0 %v418
        %v473 = vpop.f32.mrf.mxu0
        %v474 = vadd.f32 %v451, %v473
        %475 = vmatmul.f32.gmra.mxu0 %v419
        %v476 = vpop.f32.mrf.mxu0
        %v477 = vadd.f32 %v451, %v476
        %478 = vmatmul.f32.gmra.mxu0 %v420
        %v479 = vpop.f32.mrf.mxu0
        %v480 = vadd.f32 %v451, %v479
        %481 = vmatmul.f32.gmra.mxu0 %v421
        %v482 = vpop.f32.mrf.mxu0
        %v483 = vadd.f32 %v451, %v482
        %484 = vmatmul.f32.gmra.mxu0 %v422
        %v485 = vpop.f32.mrf.mxu0
        %v486 = vadd.f32 %v451, %v485
        %487 = vmatmul.f32.gmra.mxu0 %v423
        %v488 = vpop.f32.mrf.mxu0
        %v489 = vadd.f32 %v451, %v488
        %490 = vmatmul.f32.gmra.mxu0 %v424
        %v491 = vpop.f32.mrf.mxu0
        %v492 = vadd.f32 %v451, %v491
        %493 = vmatmul.f32.gmra.mxu0 %v425
        %v494 = vpop.f32.mrf.mxu0
        %v495 = vadd.f32 %v451, %v494
        %496 = vmatmul.f32.gmra.mxu0 %v426
        %v497 = vpop.f32.mrf.mxu0
        %v498 = vadd.f32 %v451, %v497
        %499 = vmatmul.f32.gmra.mxu0 %v427
        %v500 = vpop.f32.mrf.mxu0
        %v501 = vadd.f32 %v451, %v500
        %502 = vmatmul.f32.gmra.mxu0 %v428
        %v503 = vpop.f32.mrf.mxu0
        %v504 = vadd.f32 %v451, %v503
        %505 = vmatmul.f32.gmra.mxu0 %v429
        %v506 = vpop.f32.mrf.mxu0
        %v507 = vadd.f32 %v451, %v506
        %508 = vmatmul.f32.gmra.mxu0 %v430
        %v509 = vpop.f32.mrf.mxu0
        %v510 = vadd.f32 %v451, %v509
        %511 = vmatmul.f32.gmra.mxu0 %v431
        %v512 = vpop.f32.mrf.mxu0
        %v513 = vadd.f32 %v451, %v512
        %514 = vmatmul.f32.gmra.mxu0 %v432
        %v515 = vpop.f32.mrf.mxu0
        %v516 = vadd.f32 %v451, %v515
        %517 = vdwg.mxu0
        %v518 = vmax.f32 %v471, 0.0
        %v519 = vmax.f32 %v474, 0.0
        %v520 = vmax.f32 %v477, 0.0
        %v521 = vmax.f32 %v480, 0.0
        %v522 = vmax.f32 %v483, 0.0
        %v523 = vmax.f32 %v486, 0.0
        %v524 = vmax.f32 %v489, 0.0
        %v525 = vmax.f32 %v492, 0.0
        %v526 = vmax.f32 %v495, 0.0
        %v527 = vmax.f32 %v498, 0.0
        %v528 = vmax.f32 %v501, 0.0
        %v529 = vmax.f32 %v504, 0.0
        %v530 = vmax.f32 %v507, 0.0
        %v531 = vmax.f32 %v510, 0.0
        %v532 = vmax.f32 %v513, 0.0
        %v533 = vmax.f32 %v516, 0.0
        %v534 = vld [vmem:[%s5] sm:$0x1]
        %s535 = sld [smem:[#allocation2]]
        %v536 = vstv %s535
        %537 = vmatpush.xpose.msra.mxu0 %v533
        %538 = vmatpush.xpose.msra.mxu0 %v532
        %539 = vmatpush.xpose.msra.mxu0 %v531
        %540 = vmatpush.xpose.msra.mxu0 %v530
        %541 = vmatpush.xpose.msra.mxu0 %v529
        %542 = vmatpush.xpose.msra.mxu0 %v528
        %543 = vmatpush.xpose.msra.mxu0 %v527
        %544 = vmatpush.xpose.msra.mxu0 %v526
        %545 = vmatpush.xpose.msra.mxu0 %v525
        %546 = vmatpush.xpose.msra.mxu0 %v524
        %547 = vmatpush.xpose.msra.mxu0 %v523
        %548 = vmatpush.xpose.msra.mxu0 %v522
        %549 = vmatpush.xpose.msra.mxu0 %v521
        %550 = vmatpush.xpose.msra.mxu0 %v520
        %551 = vmatpush.xpose.msra.mxu0 %v519
        %552 = vmatpush.xpose.msra.mxu0 %v518
        %553 = vmatmul.f32.gmra.mxu0 %v534
        %v554 = vpop.f32.mrf.mxu0
        %v555 = vadd.f32 %v536, %v554
        %556 = vdwg.mxu0
        %557 = vst [vmem:[%s272] sm:$0x1] %v555
        %s558 = sand.u32 %s182, 1
        %s559 = scalar_lea.sflag [#allocation4], %s558
        %s560 = sand.u32 %s182, 1
        %s561 = scalar_lea.vmem [#allocation3], %s560
        // Predicated region
        $region49: #{tpu_custom_call.1} parent=47 // pred_check
          %p562 = pneg %p192
        $region50: #{tpu_custom_call.1} parent=47 // pred_check_branch
          %564 = sbr.rel (%p562) target = $region52
        $region51: #{tpu_custom_call.1} parent=47 // pred_region
          %566 = vsyncadd %s559, 0
          %s567 = scalar_lea.hbm %s7, %s22
          %s569 = sshll.u32 %s561, 4
          %s570 = int_to_ptr.vmem [resolvable:$true] %s569
          %s571 = sshll.u32 %s567, 4
          %s572 = int_to_ptr.hbm [resolvable:$true] %s571
          %574 = dma.vmem_to_hbm [thread:$0]  %s570, 16, %s572, %s559
        $region52: #{tpu_custom_call.1} parent=47 // pred_fallthru
          _
      $region48: #{tpu_custom_call.1} parent=5 // pred_fallthru
        _
      %p575 = scmp.le.s32.totalorder 2, %s17
      // Predicated region
      $region53: #{tpu_custom_call.1} parent=5 // pred_check
        %p576 = pneg %p575
      $region54: #{tpu_custom_call.1} parent=5 // pred_check_branch
        %578 = sbr.rel (%p576) target = $region56
      $region55: #{tpu_custom_call.1} parent=5 // pred_region
        %s579 = ssub.s32 %s17, 2
        // Predicated region
        $region57: #{tpu_custom_call.1} parent=55 // pred_check
          %p580 = pneg %p198
        $region58: #{tpu_custom_call.1} parent=55 // pred_check_branch
          %582 = sbr.rel (%p580) target = $region60
        $region59: #{tpu_custom_call.1} parent=55 // pred_region
          %s583 = sand.u32 %s183, 1
          %s584 = scalar_lea.sflag [#allocation4], %s583
          %s585 = sand.u32 %s183, 1
          %s586 = scalar_lea.vmem [#allocation3], %s585
          %588 = dma.done %s584, 16
        $region60: #{tpu_custom_call.1} parent=55 // pred_fallthru
          _
      $region56: #{tpu_custom_call.1} parent=5 // pred_fallthru
        _
    $region6: #{tpu_custom_call.1} parent=1 // loop_footer
      %s21 = sadd.s32 1, %s17
    $region7: #{tpu_custom_call.1} parent=1 // loop_footer_branch
      %16 = sbr.rel target = $region3
    $region8: #{tpu_custom_call.1} parent=1 // loop_exit
      _
    %589 = vsyncpa [#allocation4], 1
    %s590 = scalar_lea.sflag [#allocation4], 1
    %591 = vsyncpa %s590, 1

</llo_original>
